<compile_context>
chip_gen: v6e
topology: v6e:2x2x1
jax: 0.10.0
libtpu: 0.0.40
codegen_flags: <defaults>
</compile_context>

<pallas_src>
import jax
import jax.numpy as jnp
from jax.experimental import pallas as pl
from jax.experimental.pallas import tpu as pltpu

MIN_SPEED = 0.0
MAX_SPEED = 2.0

_LANES = 128          # lane-dense batch layout
_MAX_BLOCK_ROWS = 2048  # (2048, 128) f32 = 1 MiB per block


def _softplus(z):
    # Matches torch.nn.functional.softplus (beta=1, threshold=20).
    return jnp.where(z > 20.0, z, jnp.log1p(jnp.exp(jnp.minimum(z, 20.0))))


def wiedmann_kernel(p_ref, s_ref, o_ref):
    # p_ref: SMEM f32[43]  layout: w_h[0:8], b_h[8:16], w_out[16:40] (3x8 row-major),
    #                              b_out[40:43]
    # s_ref / o_ref: VMEM f32[tm, 128] — batch elements laid out lane-dense.
    s = s_ref[...]

    # Head accumulators initialized with biases (scalar broadcast from SMEM).
    z0 = jnp.full_like(s, p_ref[40])   # v0 head
    z1 = jnp.full_like(s, p_ref[41])   # l head
    z2 = jnp.full_like(s, p_ref[42])   # T head

    # Fully unrolled hidden layer (8 units): relu FMA + 3 scalar-weight FMAs each.
    for j in range(8):
        xj = jnp.maximum(s * p_ref[j] + p_ref[8 + j], 0.0)
        z0 = z0 + xj * p_ref[16 + j]
        z1 = z1 + xj * p_ref[24 + j]
        z2 = z2 + xj * p_ref[32 + j]

    v0 = jnp.maximum(_softplus(z0), 0.1)
    l = jnp.maximum(_softplus(z1), 0.1)
    T = jnp.maximum(_softplus(z2), 0.1)

    ms = jnp.maximum(s, 0.1)
    exponent = jnp.clip((l - ms) / (v0 * T), -10.0, 10.0)
    speed = v0 * (1.0 - jnp.exp(exponent))
    o_ref[...] = speed * (MAX_SPEED - MIN_SPEED) + MIN_SPEED


def _flatten_params(params):
    return jnp.concatenate(
        [
            params["w_h"].reshape(-1),        # 8
            params["b_h"].reshape(-1),        # 8
            params["w_out"].reshape(-1),      # 24 (rows: v0, l, T)
            params["b_out"].reshape(-1),      # 3
        ]
    ).astype(jnp.float32)                      # total 43 floats


def wiedmann_forward(mean_spacing, params):
    """mean_spacing: float32 array of shape (N, 1) or (N,). Returns same shape."""
    orig_shape = mean_spacing.shape
    flat = mean_spacing.reshape(-1).astype(jnp.float32)
    n = flat.shape[0]

    # Lane-dense reshape: (rows, 128), rows padded to a multiple of the block rows.
    rows = -(-n // _LANES)
    rows8 = ((rows + 7) // 8) * 8
    tm = min(_MAX_BLOCK_ROWS, rows8)
    rows_p = ((rows8 + tm - 1) // tm) * tm
    padded = rows_p * _LANES
    if padded != n:
        flat = jnp.pad(flat, (0, padded - n))
    x2 = flat.reshape(rows_p, _LANES)

    p_flat = _flatten_params(params)
    grid = (rows_p // tm,)

    out2 = pl.pallas_call(
        wiedmann_kernel,
        out_shape=jax.ShapeDtypeStruct((rows_p, _LANES), jnp.float32),
        grid_spec=pltpu.PrefetchScalarGridSpec(
            num_scalar_prefetch=1,             # params -> SMEM
            grid=grid,
            in_specs=[
                pl.BlockSpec((tm, _LANES), lambda i, p: (i, 0)),
            ],
            out_specs=pl.BlockSpec((tm, _LANES), lambda i, p: (i, 0)),
        ),
        compiler_params=pltpu.CompilerParams(
            dimension_semantics=("parallel",),
        ),
    )(p_flat, x2)

    return out2.reshape(-1)[:n].reshape(orig_shape)


def init_params(key):
    """Deterministic init mimicking nn.Linear default (uniform +/- 1/sqrt(fan_in))."""
    k1, k2, k3, k4, k5, k6, k7, k8 = jax.random.split(key, 8)
    bound_h = 1.0                     # 1/sqrt(1)
    w_h = jax.random.uniform(k1, (8,), jnp.float32, -bound_h, bound_h)
    b_h = jax.random.uniform(k2, (8,), jnp.float32, -bound_h, bound_h)
    bound_o = 1.0 / jnp.sqrt(8.0)
    w_v0 = jax.random.uniform(k3, (1, 8), jnp.float32, -bound_o, bound_o)
    w_l = jax.random.uniform(k4, (1, 8), jnp.float32, -bound_o, bound_o)
    w_T = jax.random.uniform(k5, (1, 8), jnp.float32, -bound_o, bound_o)
    b_v0 = jax.random.uniform(k6, (1,), jnp.float32, -bound_o, bound_o)
    b_l = jax.random.uniform(k7, (1,), jnp.float32, -bound_o, bound_o)
    b_T = jax.random.uniform(k8, (1,), jnp.float32, -bound_o, bound_o)
    return {
        "w_h": w_h,                                              # (8,)
        "b_h": b_h,                                              # (8,)
        "w_out": jnp.concatenate([w_v0, w_l, w_T], axis=0),      # (3, 8) rows: v0,l,T
        "b_out": jnp.concatenate([b_v0, b_l, b_T], axis=0),      # (3,)
    }


def reference_forward(mean_spacing, params):
    """Pure-JAX reference matching the PyTorch forward exactly."""
    ms2 = mean_spacing.reshape(-1, 1).astype(jnp.float32)
    x = jnp.maximum(ms2 * params["w_h"][None, :] + params["b_h"][None, :], 0.0)  # (N,8)
    z = x @ params["w_out"].T + params["b_out"][None, :]                          # (N,3)
    sp = jnp.where(z > 20.0, z, jnp.log1p(jnp.exp(jnp.minimum(z, 20.0))))
    sp = jnp.maximum(sp, 0.1)
    v0, l, T = sp[:, 0:1], sp[:, 1:2], sp[:, 2:3]
    msc = jnp.maximum(ms2, 0.1)
    exponent = jnp.clip((l - msc) / (v0 * T), -10.0, 10.0)
    speed = v0 * (1.0 - jnp.exp(exponent))
    speed = speed * (MAX_SPEED - MIN_SPEED) + MIN_SPEED
    return speed.reshape(mean_spacing.shape)


if __name__ == "__main__":
    key = jax.random.PRNGKey(0)
    pkey, xkey = jax.random.split(key)
    params = init_params(pkey)

    # Small batch, non-multiple of 128 to exercise the padding path.
    N = 1000
    mean_spacing = jax.random.uniform(xkey, (N, 1), jnp.float32, 0.0, 5.0)

    out = wiedmann_forward(mean_spacing, params)
    out = jax.block_until_ready(out)

    ref = reference_forward(mean_spacing, params)
    assert out.shape == (N, 1)
    assert jnp.allclose(out, ref, atol=1e-5, rtol=1e-5), "mismatch vs reference"

    print("KERNEL_OK")
</pallas_src>

<mosaic_0001>
module attributes {stable_mosaic.version = 11 : i64} {
  func.func @wiedmann_kernel(%arg0: i32, %arg1: memref<43xf32, #tpu.memory_space<smem>>, %arg2: memref<8x128xf32, #tpu.memory_space<vmem>>, %arg3: memref<8x128xf32, #tpu.memory_space<vmem>>) attributes {dimension_semantics = [#tpu.dimension_semantics<parallel>], iteration_bounds = array<i64: 1>, scalar_prefetch = 1 : i64, scratch_operands = 0 : i64, tpu.core_type = #tpu.core_type<tc>, window_params = [{transform_indices = @transform_0, window_bounds = array<i64: 8, 128>}, {transform_indices = @transform_1, window_bounds = array<i64: 8, 128>}]} {
    %c0 = arith.constant 0 : index
    %c0_0 = arith.constant 0 : index
    %0 = vector.load %arg2[%c0, %c0_0] : memref<8x128xf32, #tpu.memory_space<vmem>>, vector<8x128xf32>
    %c40 = arith.constant 40 : index
    %1 = memref.load %arg1[%c40] : memref<43xf32, #tpu.memory_space<smem>>
    %2 = vector.broadcast %1 : f32 to vector<8x128xf32>
    %c41 = arith.constant 41 : index
    %3 = memref.load %arg1[%c41] : memref<43xf32, #tpu.memory_space<smem>>
    %4 = vector.broadcast %3 : f32 to vector<8x128xf32>
    %c42 = arith.constant 42 : index
    %5 = memref.load %arg1[%c42] : memref<43xf32, #tpu.memory_space<smem>>
    %6 = vector.broadcast %5 : f32 to vector<8x128xf32>
    %c0_1 = arith.constant 0 : index
    %7 = memref.load %arg1[%c0_1] : memref<43xf32, #tpu.memory_space<smem>>
    %8 = vector.broadcast %7 : f32 to vector<8x128xf32>
    %9 = arith.mulf %0, %8 : vector<8x128xf32>
    %c8 = arith.constant 8 : index
    %10 = memref.load %arg1[%c8] : memref<43xf32, #tpu.memory_space<smem>>
    %11 = vector.broadcast %10 : f32 to vector<8x128xf32>
    %12 = arith.addf %9, %11 : vector<8x128xf32>
    %cst = arith.constant 0.000000e+00 : f32
    %13 = vector.broadcast %cst : f32 to vector<8x128xf32>
    %14 = arith.maximumf %12, %13 : vector<8x128xf32>
    %c16 = arith.constant 16 : index
    %15 = memref.load %arg1[%c16] : memref<43xf32, #tpu.memory_space<smem>>
    %16 = vector.broadcast %15 : f32 to vector<8x128xf32>
    %17 = arith.mulf %14, %16 : vector<8x128xf32>
    %18 = arith.addf %2, %17 : vector<8x128xf32>
    %c24 = arith.constant 24 : index
    %19 = memref.load %arg1[%c24] : memref<43xf32, #tpu.memory_space<smem>>
    %20 = vector.broadcast %19 : f32 to vector<8x128xf32>
    %21 = arith.mulf %14, %20 : vector<8x128xf32>
    %22 = arith.addf %4, %21 : vector<8x128xf32>
    %c32 = arith.constant 32 : index
    %23 = memref.load %arg1[%c32] : memref<43xf32, #tpu.memory_space<smem>>
    %24 = vector.broadcast %23 : f32 to vector<8x128xf32>
    %25 = arith.mulf %14, %24 : vector<8x128xf32>
    %26 = arith.addf %6, %25 : vector<8x128xf32>
    %c1 = arith.constant 1 : index
    %27 = memref.load %arg1[%c1] : memref<43xf32, #tpu.memory_space<smem>>
    %28 = vector.broadcast %27 : f32 to vector<8x128xf32>
    %29 = arith.mulf %0, %28 : vector<8x128xf32>
    %c9 = arith.constant 9 : index
    %30 = memref.load %arg1[%c9] : memref<43xf32, #tpu.memory_space<smem>>
    %31 = vector.broadcast %30 : f32 to vector<8x128xf32>
    %32 = arith.addf %29, %31 : vector<8x128xf32>
    %cst_2 = arith.constant 0.000000e+00 : f32
    %33 = vector.broadcast %cst_2 : f32 to vector<8x128xf32>
    %34 = arith.maximumf %32, %33 : vector<8x128xf32>
    %c17 = arith.constant 17 : index
    %35 = memref.load %arg1[%c17] : memref<43xf32, #tpu.memory_space<smem>>
    %36 = vector.broadcast %35 : f32 to vector<8x128xf32>
    %37 = arith.mulf %34, %36 : vector<8x128xf32>
    %38 = arith.addf %18, %37 : vector<8x128xf32>
    %c25 = arith.constant 25 : index
    %39 = memref.load %arg1[%c25] : memref<43xf32, #tpu.memory_space<smem>>
    %40 = vector.broadcast %39 : f32 to vector<8x128xf32>
    %41 = arith.mulf %34, %40 : vector<8x128xf32>
    %42 = arith.addf %22, %41 : vector<8x128xf32>
    %c33 = arith.constant 33 : index
    %43 = memref.load %arg1[%c33] : memref<43xf32, #tpu.memory_space<smem>>
    %44 = vector.broadcast %43 : f32 to vector<8x128xf32>
    %45 = arith.mulf %34, %44 : vector<8x128xf32>
    %46 = arith.addf %26, %45 : vector<8x128xf32>
    %c2 = arith.constant 2 : index
    %47 = memref.load %arg1[%c2] : memref<43xf32, #tpu.memory_space<smem>>
    %48 = vector.broadcast %47 : f32 to vector<8x128xf32>
    %49 = arith.mulf %0, %48 : vector<8x128xf32>
    %c10 = arith.constant 10 : index
    %50 = memref.load %arg1[%c10] : memref<43xf32, #tpu.memory_space<smem>>
    %51 = vector.broadcast %50 : f32 to vector<8x128xf32>
    %52 = arith.addf %49, %51 : vector<8x128xf32>
    %cst_3 = arith.constant 0.000000e+00 : f32
    %53 = vector.broadcast %cst_3 : f32 to vector<8x128xf32>
    %54 = arith.maximumf %52, %53 : vector<8x128xf32>
    %c18 = arith.constant 18 : index
    %55 = memref.load %arg1[%c18] : memref<43xf32, #tpu.memory_space<smem>>
    %56 = vector.broadcast %55 : f32 to vector<8x128xf32>
    %57 = arith.mulf %54, %56 : vector<8x128xf32>
    %58 = arith.addf %38, %57 : vector<8x128xf32>
    %c26 = arith.constant 26 : index
    %59 = memref.load %arg1[%c26] : memref<43xf32, #tpu.memory_space<smem>>
    %60 = vector.broadcast %59 : f32 to vector<8x128xf32>
    %61 = arith.mulf %54, %60 : vector<8x128xf32>
    %62 = arith.addf %42, %61 : vector<8x128xf32>
    %c34 = arith.constant 34 : index
    %63 = memref.load %arg1[%c34] : memref<43xf32, #tpu.memory_space<smem>>
    %64 = vector.broadcast %63 : f32 to vector<8x128xf32>
    %65 = arith.mulf %54, %64 : vector<8x128xf32>
    %66 = arith.addf %46, %65 : vector<8x128xf32>
    %c3 = arith.constant 3 : index
    %67 = memref.load %arg1[%c3] : memref<43xf32, #tpu.memory_space<smem>>
    %68 = vector.broadcast %67 : f32 to vector<8x128xf32>
    %69 = arith.mulf %0, %68 : vector<8x128xf32>
    %c11 = arith.constant 11 : index
    %70 = memref.load %arg1[%c11] : memref<43xf32, #tpu.memory_space<smem>>
    %71 = vector.broadcast %70 : f32 to vector<8x128xf32>
    %72 = arith.addf %69, %71 : vector<8x128xf32>
    %cst_4 = arith.constant 0.000000e+00 : f32
    %73 = vector.broadcast %cst_4 : f32 to vector<8x128xf32>
    %74 = arith.maximumf %72, %73 : vector<8x128xf32>
    %c19 = arith.constant 19 : index
    %75 = memref.load %arg1[%c19] : memref<43xf32, #tpu.memory_space<smem>>
    %76 = vector.broadcast %75 : f32 to vector<8x128xf32>
    %77 = arith.mulf %74, %76 : vector<8x128xf32>
    %78 = arith.addf %58, %77 : vector<8x128xf32>
    %c27 = arith.constant 27 : index
    %79 = memref.load %arg1[%c27] : memref<43xf32, #tpu.memory_space<smem>>
    %80 = vector.broadcast %79 : f32 to vector<8x128xf32>
    %81 = arith.mulf %74, %80 : vector<8x128xf32>
    %82 = arith.addf %62, %81 : vector<8x128xf32>
    %c35 = arith.constant 35 : index
    %83 = memref.load %arg1[%c35] : memref<43xf32, #tpu.memory_space<smem>>
    %84 = vector.broadcast %83 : f32 to vector<8x128xf32>
    %85 = arith.mulf %74, %84 : vector<8x128xf32>
    %86 = arith.addf %66, %85 : vector<8x128xf32>
    %c4 = arith.constant 4 : index
    %87 = memref.load %arg1[%c4] : memref<43xf32, #tpu.memory_space<smem>>
    %88 = vector.broadcast %87 : f32 to vector<8x128xf32>
    %89 = arith.mulf %0, %88 : vector<8x128xf32>
    %c12 = arith.constant 12 : index
    %90 = memref.load %arg1[%c12] : memref<43xf32, #tpu.memory_space<smem>>
    %91 = vector.broadcast %90 : f32 to vector<8x128xf32>
    %92 = arith.addf %89, %91 : vector<8x128xf32>
    %cst_5 = arith.constant 0.000000e+00 : f32
    %93 = vector.broadcast %cst_5 : f32 to vector<8x128xf32>
    %94 = arith.maximumf %92, %93 : vector<8x128xf32>
    %c20 = arith.constant 20 : index
    %95 = memref.load %arg1[%c20] : memref<43xf32, #tpu.memory_space<smem>>
    %96 = vector.broadcast %95 : f32 to vector<8x128xf32>
    %97 = arith.mulf %94, %96 : vector<8x128xf32>
    %98 = arith.addf %78, %97 : vector<8x128xf32>
    %c28 = arith.constant 28 : index
    %99 = memref.load %arg1[%c28] : memref<43xf32, #tpu.memory_space<smem>>
    %100 = vector.broadcast %99 : f32 to vector<8x128xf32>
    %101 = arith.mulf %94, %100 : vector<8x128xf32>
    %102 = arith.addf %82, %101 : vector<8x128xf32>
    %c36 = arith.constant 36 : index
    %103 = memref.load %arg1[%c36] : memref<43xf32, #tpu.memory_space<smem>>
    %104 = vector.broadcast %103 : f32 to vector<8x128xf32>
    %105 = arith.mulf %94, %104 : vector<8x128xf32>
    %106 = arith.addf %86, %105 : vector<8x128xf32>
    %c5 = arith.constant 5 : index
    %107 = memref.load %arg1[%c5] : memref<43xf32, #tpu.memory_space<smem>>
    %108 = vector.broadcast %107 : f32 to vector<8x128xf32>
    %109 = arith.mulf %0, %108 : vector<8x128xf32>
    %c13 = arith.constant 13 : index
    %110 = memref.load %arg1[%c13] : memref<43xf32, #tpu.memory_space<smem>>
    %111 = vector.broadcast %110 : f32 to vector<8x128xf32>
    %112 = arith.addf %109, %111 : vector<8x128xf32>
    %cst_6 = arith.constant 0.000000e+00 : f32
    %113 = vector.broadcast %cst_6 : f32 to vector<8x128xf32>
    %114 = arith.maximumf %112, %113 : vector<8x128xf32>
    %c21 = arith.constant 21 : index
    %115 = memref.load %arg1[%c21] : memref<43xf32, #tpu.memory_space<smem>>
    %116 = vector.broadcast %115 : f32 to vector<8x128xf32>
    %117 = arith.mulf %114, %116 : vector<8x128xf32>
    %118 = arith.addf %98, %117 : vector<8x128xf32>
    %c29 = arith.constant 29 : index
    %119 = memref.load %arg1[%c29] : memref<43xf32, #tpu.memory_space<smem>>
    %120 = vector.broadcast %119 : f32 to vector<8x128xf32>
    %121 = arith.mulf %114, %120 : vector<8x128xf32>
    %122 = arith.addf %102, %121 : vector<8x128xf32>
    %c37 = arith.constant 37 : index
    %123 = memref.load %arg1[%c37] : memref<43xf32, #tpu.memory_space<smem>>
    %124 = vector.broadcast %123 : f32 to vector<8x128xf32>
    %125 = arith.mulf %114, %124 : vector<8x128xf32>
    %126 = arith.addf %106, %125 : vector<8x128xf32>
    %c6 = arith.constant 6 : index
    %127 = memref.load %arg1[%c6] : memref<43xf32, #tpu.memory_space<smem>>
    %128 = vector.broadcast %127 : f32 to vector<8x128xf32>
    %129 = arith.mulf %0, %128 : vector<8x128xf32>
    %c14 = arith.constant 14 : index
    %130 = memref.load %arg1[%c14] : memref<43xf32, #tpu.memory_space<smem>>
    %131 = vector.broadcast %130 : f32 to vector<8x128xf32>
    %132 = arith.addf %129, %131 : vector<8x128xf32>
    %cst_7 = arith.constant 0.000000e+00 : f32
    %133 = vector.broadcast %cst_7 : f32 to vector<8x128xf32>
    %134 = arith.maximumf %132, %133 : vector<8x128xf32>
    %c22 = arith.constant 22 : index
    %135 = memref.load %arg1[%c22] : memref<43xf32, #tpu.memory_space<smem>>
    %136 = vector.broadcast %135 : f32 to vector<8x128xf32>
    %137 = arith.mulf %134, %136 : vector<8x128xf32>
    %138 = arith.addf %118, %137 : vector<8x128xf32>
    %c30 = arith.constant 30 : index
    %139 = memref.load %arg1[%c30] : memref<43xf32, #tpu.memory_space<smem>>
    %140 = vector.broadcast %139 : f32 to vector<8x128xf32>
    %141 = arith.mulf %134, %140 : vector<8x128xf32>
    %142 = arith.addf %122, %141 : vector<8x128xf32>
    %c38 = arith.constant 38 : index
    %143 = memref.load %arg1[%c38] : memref<43xf32, #tpu.memory_space<smem>>
    %144 = vector.broadcast %143 : f32 to vector<8x128xf32>
    %145 = arith.mulf %134, %144 : vector<8x128xf32>
    %146 = arith.addf %126, %145 : vector<8x128xf32>
    %c7 = arith.constant 7 : index
    %147 = memref.load %arg1[%c7] : memref<43xf32, #tpu.memory_space<smem>>
    %148 = vector.broadcast %147 : f32 to vector<8x128xf32>
    %149 = arith.mulf %0, %148 : vector<8x128xf32>
    %c15 = arith.constant 15 : index
    %150 = memref.load %arg1[%c15] : memref<43xf32, #tpu.memory_space<smem>>
    %151 = vector.broadcast %150 : f32 to vector<8x128xf32>
    %152 = arith.addf %149, %151 : vector<8x128xf32>
    %cst_8 = arith.constant 0.000000e+00 : f32
    %153 = vector.broadcast %cst_8 : f32 to vector<8x128xf32>
    %154 = arith.maximumf %152, %153 : vector<8x128xf32>
    %c23 = arith.constant 23 : index
    %155 = memref.load %arg1[%c23] : memref<43xf32, #tpu.memory_space<smem>>
    %156 = vector.broadcast %155 : f32 to vector<8x128xf32>
    %157 = arith.mulf %154, %156 : vector<8x128xf32>
    %158 = arith.addf %138, %157 : vector<8x128xf32>
    %c31 = arith.constant 31 : index
    %159 = memref.load %arg1[%c31] : memref<43xf32, #tpu.memory_space<smem>>
    %160 = vector.broadcast %159 : f32 to vector<8x128xf32>
    %161 = arith.mulf %154, %160 : vector<8x128xf32>
    %162 = arith.addf %142, %161 : vector<8x128xf32>
    %c39 = arith.constant 39 : index
    %163 = memref.load %arg1[%c39] : memref<43xf32, #tpu.memory_space<smem>>
    %164 = vector.broadcast %163 : f32 to vector<8x128xf32>
    %165 = arith.mulf %154, %164 : vector<8x128xf32>
    %166 = arith.addf %146, %165 : vector<8x128xf32>
    %cst_9 = arith.constant 2.000000e+01 : f32
    %167 = vector.broadcast %cst_9 : f32 to vector<8x128xf32>
    %168 = arith.cmpf ogt, %158, %167 : vector<8x128xf32>
    %cst_10 = arith.constant 2.000000e+01 : f32
    %169 = vector.broadcast %cst_10 : f32 to vector<8x128xf32>
    %170 = arith.minimumf %158, %169 : vector<8x128xf32>
    %171 = math.exp %170 : vector<8x128xf32>
    %172 = math.log1p %171 : vector<8x128xf32>
    %173 = arith.select %168, %158, %172 : vector<8x128xi1>, vector<8x128xf32>
    %cst_11 = arith.constant 1.000000e-01 : f32
    %174 = vector.broadcast %cst_11 : f32 to vector<8x128xf32>
    %175 = arith.maximumf %173, %174 : vector<8x128xf32>
    %cst_12 = arith.constant 2.000000e+01 : f32
    %176 = vector.broadcast %cst_12 : f32 to vector<8x128xf32>
    %177 = arith.cmpf ogt, %162, %176 : vector<8x128xf32>
    %cst_13 = arith.constant 2.000000e+01 : f32
    %178 = vector.broadcast %cst_13 : f32 to vector<8x128xf32>
    %179 = arith.minimumf %162, %178 : vector<8x128xf32>
    %180 = math.exp %179 : vector<8x128xf32>
    %181 = math.log1p %180 : vector<8x128xf32>
    %182 = arith.select %177, %162, %181 : vector<8x128xi1>, vector<8x128xf32>
    %cst_14 = arith.constant 1.000000e-01 : f32
    %183 = vector.broadcast %cst_14 : f32 to vector<8x128xf32>
    %184 = arith.maximumf %182, %183 : vector<8x128xf32>
    %cst_15 = arith.constant 2.000000e+01 : f32
    %185 = vector.broadcast %cst_15 : f32 to vector<8x128xf32>
    %186 = arith.cmpf ogt, %166, %185 : vector<8x128xf32>
    %cst_16 = arith.constant 2.000000e+01 : f32
    %187 = vector.broadcast %cst_16 : f32 to vector<8x128xf32>
    %188 = arith.minimumf %166, %187 : vector<8x128xf32>
    %189 = math.exp %188 : vector<8x128xf32>
    %190 = math.log1p %189 : vector<8x128xf32>
    %191 = arith.select %186, %166, %190 : vector<8x128xi1>, vector<8x128xf32>
    %cst_17 = arith.constant 1.000000e-01 : f32
    %192 = vector.broadcast %cst_17 : f32 to vector<8x128xf32>
    %193 = arith.maximumf %191, %192 : vector<8x128xf32>
    %cst_18 = arith.constant 1.000000e-01 : f32
    %194 = vector.broadcast %cst_18 : f32 to vector<8x128xf32>
    %195 = arith.maximumf %0, %194 : vector<8x128xf32>
    %196 = arith.subf %184, %195 : vector<8x128xf32>
    %197 = arith.mulf %175, %193 : vector<8x128xf32>
    %198 = arith.divf %196, %197 : vector<8x128xf32>
    %cst_19 = arith.constant -1.000000e+01 : f32
    %cst_20 = arith.constant 1.000000e+01 : f32
    %199 = vector.broadcast %cst_19 : f32 to vector<8x128xf32>
    %200 = arith.maximumf %199, %198 : vector<8x128xf32>
    %201 = vector.broadcast %cst_20 : f32 to vector<8x128xf32>
    %202 = arith.minimumf %201, %200 : vector<8x128xf32>
    %203 = math.exp %202 : vector<8x128xf32>
    %cst_21 = arith.constant 1.000000e+00 : f32
    %204 = vector.broadcast %cst_21 : f32 to vector<8x128xf32>
    %205 = arith.subf %204, %203 : vector<8x128xf32>
    %206 = arith.mulf %175, %205 : vector<8x128xf32>
    %cst_22 = arith.constant 2.000000e+00 : f32
    %207 = vector.broadcast %cst_22 : f32 to vector<8x128xf32>
    %208 = arith.mulf %206, %207 : vector<8x128xf32>
    %cst_23 = arith.constant 0.000000e+00 : f32
    %209 = vector.broadcast %cst_23 : f32 to vector<8x128xf32>
    %210 = arith.addf %208, %209 : vector<8x128xf32>
    %c0_24 = arith.constant 0 : index
    %c0_25 = arith.constant 0 : index
    %211 = vector.load %arg3[%c0_24, %c0_25] : memref<8x128xf32, #tpu.memory_space<vmem>>, vector<8x128xf32>
    tpu.vector_store %arg3[%c0_24, %c0_25], %210 {strides = array<i32>} : memref<8x128xf32, #tpu.memory_space<vmem>>, vector<8x128xf32>,
    return
  }
  func.func @transform_0(%arg0: i32, %arg1: memref<43xf32, #tpu.memory_space<smem>>) -> (i32, i32) {
    %c0_i32 = arith.constant 0 : i32
    %c0_i32_0 = arith.constant 0 : i32
    return %arg0, %c0_i32 : i32, i32
  }
  func.func @transform_1(%arg0: i32, %arg1: memref<43xf32, #tpu.memory_space<smem>>) -> (i32, i32) {
    %c0_i32 = arith.constant 0 : i32
    %c0_i32_0 = arith.constant 0 : i32
    return %arg0, %c0_i32 : i32, i32
  }
}

</mosaic_0001>

<llo_original>
// kernel: tpu_custom_call.1
$region0: #{tpu_custom_call.1}
  #allocation0 [shape = 'u32[]', space=smem, size = 0x4, offset = 0x4, fixed_abs, tag = 'smem constant byte address 0x4 - core index']
  #allocation1 [shape = 'u32[144,128]{1,0:T(1,128)}', space=vmem, size = 0x12000, scoped, tag = 'internal scratch']
  #allocation2 [shape = 's32[1]{0}', space=sflag, size = 0x4, scoped, tag = 'scoped memory for tpu_custom_call.1']
  #allocation3 [shape = 'u8[512]{0}', space=smem, size = 0x200, scoped, tag = 'prefetched SMEM operand 0']
  %s0 = inlined_call_operand.hbm [shape: f32[43], index: 0, kind: input, shape index: {}]
  %s1 = inlined_call_operand.hbm [shape: f32[8,128], index: 1, kind: input, shape index: {}]
  %s2 = inlined_call_operand.hbm [shape: f32[8,128], index: 2, kind: output, shape index: {}]
  %s3 = sld [smem:[#allocation0]]
  $region18: #{tpu_custom_call.1} parent=0
    _
  %s5 = ssub.s32 1, %s3
  %s6 = scalar_select 0, %s5, %s3
  %8 = dma.hbm_to_smem %s0, 16, [#allocation3], [#allocation2]
  %9 = dma.done [#allocation2], 16
  %10 = sfence
  $region1: #{tpu_custom_call.1} parent=0
    #allocation4 [shape = 'u8[4096]{0}', space=vmem, size = 0x1000, scoped, tag = 'input window, operand 1, single buffered']
    #allocation5 [shape = 's32[1]{0}', space=sflag, size = 0x4, scoped, tag = 'scoped memory for tpu_custom_call.1']
    #allocation6 [shape = 's32[1]{0}', space=sflag, size = 0x4, scoped, tag = 'scoped memory for tpu_custom_call.1']
    #allocation7 [shape = 'u8[4096]{0}', space=vmem, size = 0x1000, scoped, tag = 'output window, operand 0, single buffered']
    %11 = vsyncpa [#allocation5], 0
    %12 = vsyncpa [#allocation6], 0
    // Predicated region
    $region2: #{tpu_custom_call.1} parent=1 // pred_check
      _
    $region3: #{tpu_custom_call.1} parent=1 // pred_check_branch
      %14 = sbr.rel (0) target = $region5
    $region4: #{tpu_custom_call.1} parent=1 // pred_region
      %s16 = ssub.s32 128, 128
      %17 = vsyncadd [#allocation5], %s16
      %s19 = sshll.u32 [#allocation4], 4
      %s20 = int_to_ptr.vmem [resolvable:$true] %s19
      %22 = dma.hbm_to_vmem [thread:$0]  %s1, 128, %s20, [#allocation5]
    $region5: #{tpu_custom_call.1} parent=1 // pred_fallthru
      _
    // Predicated region
    $region6: #{tpu_custom_call.1} parent=1 // pred_check
      _
    $region7: #{tpu_custom_call.1} parent=1 // pred_check_branch
      %24 = sbr.rel (0) target = $region9
    $region8: #{tpu_custom_call.1} parent=1 // pred_region
      %25 = dma.done [#allocation5], 128
    $region9: #{tpu_custom_call.1} parent=1 // pred_fallthru
      _
    %v26 = vld [vmem:[#allocation4] sm:$0xff]
    %s27 = sld [smem:[#allocation3 + $0x28]]
    %v28 = vstv %s27
    %s29 = sld [smem:[#allocation3 + $0x29]]
    %v30 = vstv %s29
    %s31 = sld [smem:[#allocation3 + $0x2a]]
    %v32 = vstv %s31
    %s33 = sld [smem:[#allocation3]]
    %v34 = vstv %s33
    %v35 = vmul.f32 %v26, %v34
    %s36 = sld [smem:[#allocation3 + $0x8]]
    %v37 = vstv %s36
    %v38 = vadd.f32 %v35, %v37
    %v39 = vmax.f32 %v38, 0.0
    %s40 = sld [smem:[#allocation3 + $0x10]]
    %v41 = vstv %s40
    %v42 = vmul.f32 %v39, %v41
    %v43 = vadd.f32 %v28, %v42
    %s44 = sld [smem:[#allocation3 + $0x18]]
    %v45 = vstv %s44
    %v46 = vmul.f32 %v39, %v45
    %v47 = vadd.f32 %v30, %v46
    %s48 = sld [smem:[#allocation3 + $0x20]]
    %v49 = vstv %s48
    %v50 = vmul.f32 %v39, %v49
    %v51 = vadd.f32 %v32, %v50
    %s52 = sld [smem:[#allocation3 + $0x1]]
    %v53 = vstv %s52
    %v54 = vmul.f32 %v26, %v53
    %s55 = sld [smem:[#allocation3 + $0x9]]
    %v56 = vstv %s55
    %v57 = vadd.f32 %v54, %v56
    %v58 = vmax.f32 %v57, 0.0
    %s59 = sld [smem:[#allocation3 + $0x11]]
    %v60 = vstv %s59
    %v61 = vmul.f32 %v58, %v60
    %v62 = vadd.f32 %v43, %v61
    %s63 = sld [smem:[#allocation3 + $0x19]]
    %v64 = vstv %s63
    %v65 = vmul.f32 %v58, %v64
    %v66 = vadd.f32 %v47, %v65
    %s67 = sld [smem:[#allocation3 + $0x21]]
    %v68 = vstv %s67
    %v69 = vmul.f32 %v58, %v68
    %v70 = vadd.f32 %v51, %v69
    %s71 = sld [smem:[#allocation3 + $0x2]]
    %v72 = vstv %s71
    %v73 = vmul.f32 %v26, %v72
    %s74 = sld [smem:[#allocation3 + $0xa]]
    %v75 = vstv %s74
    %v76 = vadd.f32 %v73, %v75
    %v77 = vmax.f32 %v76, 0.0
    %s78 = sld [smem:[#allocation3 + $0x12]]
    %v79 = vstv %s78
    %v80 = vmul.f32 %v77, %v79
    %v81 = vadd.f32 %v62, %v80
    %s82 = sld [smem:[#allocation3 + $0x1a]]
    %v83 = vstv %s82
    %v84 = vmul.f32 %v77, %v83
    %v85 = vadd.f32 %v66, %v84
    %s86 = sld [smem:[#allocation3 + $0x22]]
    %v87 = vstv %s86
    %v88 = vmul.f32 %v77, %v87
    %v89 = vadd.f32 %v70, %v88
    %s90 = sld [smem:[#allocation3 + $0x3]]
    %v91 = vstv %s90
    %v92 = vmul.f32 %v26, %v91
    %s93 = sld [smem:[#allocation3 + $0xb]]
    %v94 = vstv %s93
    %v95 = vadd.f32 %v92, %v94
    %v96 = vmax.f32 %v95, 0.0
    %s97 = sld [smem:[#allocation3 + $0x13]]
    %v98 = vstv %s97
    %v99 = vmul.f32 %v96, %v98
    %v100 = vadd.f32 %v81, %v99
    %s101 = sld [smem:[#allocation3 + $0x1b]]
    %v102 = vstv %s101
    %v103 = vmul.f32 %v96, %v102
    %v104 = vadd.f32 %v85, %v103
    %s105 = sld [smem:[#allocation3 + $0x23]]
    %v106 = vstv %s105
    %v107 = vmul.f32 %v96, %v106
    %v108 = vadd.f32 %v89, %v107
    %s109 = sld [smem:[#allocation3 + $0x4]]
    %v110 = vstv %s109
    %v111 = vmul.f32 %v26, %v110
    %s112 = sld [smem:[#allocation3 + $0xc]]
    %v113 = vstv %s112
    %v114 = vadd.f32 %v111, %v113
    %v115 = vmax.f32 %v114, 0.0
    %s116 = sld [smem:[#allocation3 + $0x14]]
    %v117 = vstv %s116
    %v118 = vmul.f32 %v115, %v117
    %v119 = vadd.f32 %v100, %v118
    %s120 = sld [smem:[#allocation3 + $0x1c]]
    %v121 = vstv %s120
    %v122 = vmul.f32 %v115, %v121
    %v123 = vadd.f32 %v104, %v122
    %s124 = sld [smem:[#allocation3 + $0x24]]
    %v125 = vstv %s124
    %v126 = vmul.f32 %v115, %v125
    %v127 = vadd.f32 %v108, %v126
    %s128 = sld [smem:[#allocation3 + $0x5]]
    %v129 = vstv %s128
    %v130 = vmul.f32 %v26, %v129
    %s131 = sld [smem:[#allocation3 + $0xd]]
    %v132 = vstv %s131
    %v133 = vadd.f32 %v130, %v132
    %v134 = vmax.f32 %v133, 0.0
    %s135 = sld [smem:[#allocation3 + $0x15]]
    %v136 = vstv %s135
    %v137 = vmul.f32 %v134, %v136
    %v138 = vadd.f32 %v119, %v137
    %s139 = sld [smem:[#allocation3 + $0x1d]]
    %v140 = vstv %s139
    %v141 = vmul.f32 %v134, %v140
    %v142 = vadd.f32 %v123, %v141
    %s143 = sld [smem:[#allocation3 + $0x25]]
    %v144 = vstv %s143
    %v145 = vmul.f32 %v134, %v144
    %v146 = vadd.f32 %v127, %v145
    %s147 = sld [smem:[#allocation3 + $0x6]]
    %v148 = vstv %s147
    %v149 = vmul.f32 %v26, %v148
    %s150 = sld [smem:[#allocation3 + $0xe]]
    %v151 = vstv %s150
    %v152 = vadd.f32 %v149, %v151
    %v153 = vmax.f32 %v152, 0.0
    %s154 = sld [smem:[#allocation3 + $0x16]]
    %v155 = vstv %s154
    %v156 = vmul.f32 %v153, %v155
    %v157 = vadd.f32 %v138, %v156
    %s158 = sld [smem:[#allocation3 + $0x1e]]
    %v159 = vstv %s158
    %v160 = vmul.f32 %v153, %v159
    %v161 = vadd.f32 %v142, %v160
    %s162 = sld [smem:[#allocation3 + $0x26]]
    %v163 = vstv %s162
    %v164 = vmul.f32 %v153, %v163
    %v165 = vadd.f32 %v146, %v164
    %s166 = sld [smem:[#allocation3 + $0x7]]
    %v167 = vstv %s166
    %v168 = vmul.f32 %v26, %v167
    %s169 = sld [smem:[#allocation3 + $0xf]]
    %v170 = vstv %s169
    %v171 = vadd.f32 %v168, %v170
    %v172 = vmax.f32 %v171, 0.0
    %s173 = sld [smem:[#allocation3 + $0x17]]
    %v174 = vstv %s173
    %v175 = vmul.f32 %v172, %v174
    %v176 = vadd.f32 %v157, %v175
    %s177 = sld [smem:[#allocation3 + $0x1f]]
    %v178 = vstv %s177
    %v179 = vmul.f32 %v172, %v178
    %v180 = vadd.f32 %v161, %v179
    %s181 = sld [smem:[#allocation3 + $0x27]]
    %v182 = vstv %s181
    %v183 = vmul.f32 %v172, %v182
    %v184 = vadd.f32 %v165, %v183
    %vm185 = vcmp.gt.f32.partialorder %v176, 20.0
    %v186 = vmin.f32 %v176, 20.0
    %v187 = vmul.f32 %v186, 1.442695
    %v188 = vpow.pop %v187
    %v189 = vadd.f32 %v188, 1.0
    %v190 = vlog2.pop %v189
    %v191 = vmul.f32 %v190, 0.6931472
    %v192 = vmul.f32 -0.5, %v188
    %v193 = vadd.f32 %v192, 1.0
    %v194 = vmul.f32 %v193, %v188
    %v195 = vand.u32 2147483647, %v188
    %vm196 = vcmp.lt.f32.partialorder %v195, 0.0004427343
    %v197 = vsel %vm196, %v194, %v191
    %v198 = vsel %vm185, %v176, %v197
    %v199 = vmax.f32 %v198, 0.1
    %vm200 = vcmp.gt.f32.partialorder %v180, 20.0
    %v201 = vmin.f32 %v180, 20.0
    %v202 = vmul.f32 %v201, 1.442695
    %v203 = vpow.pop %v202
    %v204 = vadd.f32 %v203, 1.0
    %v205 = vlog2.pop %v204
    %v206 = vmul.f32 %v205, 0.6931472
    %v207 = vmul.f32 -0.5, %v203
    %v208 = vadd.f32 %v207, 1.0
    %v209 = vmul.f32 %v208, %v203
    %v210 = vand.u32 2147483647, %v203
    %vm211 = vcmp.lt.f32.partialorder %v210, 0.0004427343
    %v212 = vsel %vm211, %v209, %v206
    %v213 = vsel %vm200, %v180, %v212
    %v214 = vmax.f32 %v213, 0.1
    %vm215 = vcmp.gt.f32.partialorder %v184, 20.0
    %v216 = vmin.f32 %v184, 20.0
    %v217 = vmul.f32 %v216, 1.442695
    %v218 = vpow.pop %v217
    %v219 = vadd.f32 %v218, 1.0
    %v220 = vlog2.pop %v219
    %v221 = vmul.f32 %v220, 0.6931472
    %v222 = vmul.f32 -0.5, %v218
    %v223 = vadd.f32 %v222, 1.0
    %v224 = vmul.f32 %v223, %v218
    %v225 = vand.u32 2147483647, %v218
    %vm226 = vcmp.lt.f32.partialorder %v225, 0.0004427343
    %v227 = vsel %vm226, %v224, %v221
    %v228 = vsel %vm215, %v184, %v227
    %v229 = vmax.f32 %v228, 0.1
    %v230 = vmax.f32 %v26, 0.1
    %v231 = vsub.f32 %v214, %v230
    %v232 = vmul.f32 %v199, %v229
    %v233 = vrcp.pop %v232
    %v234 = vmul.f32 %v231, %v233
    %v235 = vmax.f32 %v234, -10.0
    %v236 = vmin.f32 %v235, 10.0
    %v237 = vmul.f32 %v236, 1.442695
    %v238 = vpow.pop %v237
    %v239 = vsub.f32 1.0, %v238
    %v240 = vmul.f32 %v199, %v239
    %v241 = vmul.f32 %v240, 2.0
    %v242 = vadd.f32 %v241, 0.0
    %243 = vst [vmem:[#allocation7] sm:$0xff] %v242
    // Predicated region
    $region10: #{tpu_custom_call.1} parent=1 // pred_check
      _
    $region11: #{tpu_custom_call.1} parent=1 // pred_check_branch
      %245 = sbr.rel (0) target = $region13
    $region12: #{tpu_custom_call.1} parent=1 // pred_region
      %s247 = ssub.s32 128, 128
      %248 = vsyncadd [#allocation6], %s247
      %s250 = sshll.u32 [#allocation7], 4
      %s251 = int_to_ptr.vmem [resolvable:$true] %s250
      %253 = dma.vmem_to_hbm [thread:$0]  %s251, 128, %s2, [#allocation6]
    $region13: #{tpu_custom_call.1} parent=1 // pred_fallthru
      _
    // Predicated region
    $region14: #{tpu_custom_call.1} parent=1 // pred_check
      _
    $region15: #{tpu_custom_call.1} parent=1 // pred_check_branch
      %255 = sbr.rel (0) target = $region17
    $region16: #{tpu_custom_call.1} parent=1 // pred_region
      %256 = dma.done [#allocation6], 128
    $region17: #{tpu_custom_call.1} parent=1 // pred_fallthru
      _
    %257 = vsyncpa [#allocation5], 1
    %258 = vsyncpa [#allocation6], 1

</llo_original>
